<compile_context>
chip_gen: v7x
topology: tpu7x:2x2x1
jax: 0.10.0
libtpu: 0.0.40
codegen_flags: <defaults>
</compile_context>

<pallas_src>
import math
import functools

import jax
import jax.numpy as jnp
from jax.experimental import pallas as pl
from jax.experimental.pallas import tpu as pltpu


# ----------------------------------------------------------------------------
# Positional table (identical to the PyTorch __init__, plain JAX, done once).
# ----------------------------------------------------------------------------
def _make_pos_table(emb_size: int, maxlen: int) -> jnp.ndarray:
    den = jnp.exp(-jnp.arange(0, emb_size, 2, dtype=jnp.float32)
                  * (math.log(10000.0) / emb_size))            # (emb/2,)
    pos = jnp.arange(0, maxlen, dtype=jnp.float32)[:, None]    # (maxlen, 1)
    ang = pos * den[None, :]                                    # (maxlen, emb/2)
    pe = jnp.zeros((maxlen, emb_size), dtype=jnp.float32)
    pe = pe.at[:, 0::2].set(jnp.sin(ang))
    pe = pe.at[:, 1::2].set(jnp.cos(ang))
    return pe[:, None, :]                                       # (maxlen, 1, E)


# ----------------------------------------------------------------------------
# Tiling helpers.
# ----------------------------------------------------------------------------
def _cdiv(a: int, b: int) -> int:
    return -(-a // b)


def _choose_tiles(S: int, B: int, E: int, itemsize: int,
                  budget_elems: int = 1 << 20,    # ~4 MiB of f32 compute / tile
                  floor_elems: int = 1 << 18):    # ~1 MiB floor
    """Pick (TS, TB) for (TS, TB, E) tiles of the seq-first tensor.

    Tiles are sized by element count (dtype-independent) so the in-kernel f32
    temporaries stay bounded.  Prefers >= 4 S-tiles for cross-core sharding
    but never shrinks a tile below the ~1 MiB DMA-overhead plateau.
    """
    sub = max(8, 32 // max(itemsize, 1))      # 8 for f32, 16 for bf16, 32 for i8
    row_elems = B * E                         # one sequence position, full batch
    if row_elems <= budget_elems:
        TB = B
        ts_budget = max(1, budget_elems // row_elems)
        ts_floor = max(1, floor_elems // row_elems)
        ts_shard = max(1, _cdiv(S, 4))        # aim for >= 4 S tiles when cheap
        TS = min(S, ts_budget, max(ts_shard, ts_floor))
        TS = max(TS, 1)
    else:
        # A single full-batch sequence position already exceeds the budget:
        # tile the batch axis too (sublane-aligned), one position per tile.
        TS = 1
        TB = max(1, budget_elems // E)
        TB = min(B, max(sub, (TB // sub) * sub))
    return TS, TB


# ----------------------------------------------------------------------------
# Kernel.
# ----------------------------------------------------------------------------
def _pe_kernel(seed_ref, x_ref, pos_ref, *rest,
               apply_dropout: bool, hw_prng: bool,
               inv_keep_prob: float, keep_threshold: int):
    # x_ref:   (TS, TB, E)   trailing (TB, E) -> (sublane, lane)
    # pos_ref: (TS, 1, E)    broadcast over the batch sublanes is cheap
    if apply_dropout and not hw_prng:
        bits_ref, o_ref = rest
    else:
        (o_ref,) = rest

    x = x_ref[...].astype(jnp.float32)
    y = x + pos_ref[...]                      # broadcast (TS,1,E) -> (TS,TB,E)

    if apply_dropout:
        if hw_prng:
            # Fold (seed, si, bi) as separate seed words: no linear aliasing
            # between adjacent caller seeds and adjacent tiles.
            pltpu.prng_seed(seed_ref[0], pl.program_id(0), pl.program_id(1))
            raw = pltpu.prng_random_bits(y.shape)
            ubits = pltpu.bitcast(raw, jnp.uint32)
        else:
            ubits = bits_ref[...]
        # keep iff uniform uint32 < keep_prob * 2^32 ; single select + scale.
        keep = ubits < jnp.uint32(keep_threshold)
        y = jnp.where(keep, y, 0.0) * jnp.float32(inv_keep_prob)

    o_ref[...] = y.astype(o_ref.dtype)


# ----------------------------------------------------------------------------
# Wrapper.
# ----------------------------------------------------------------------------
def positional_encoding(token_embedding: jnp.ndarray,
                        pos_table: jnp.ndarray,
                        *,
                        dropout_rate: float = 0.1,
                        training: bool = False,
                        seed: int = 0) -> jnp.ndarray:
    """PositionalEncoding forward for seq-first input (S, B, E).

    pos_table: (maxlen, E) or (maxlen, 1, E) sinusoidal buffer.
    NOTE: the dropout mask depends on the chosen tiling and on the backend
    (hardware PRNG on TPU, host PRNG elsewhere); callers must vary `seed`
    across layers / steps.
    """
    x = token_embedding
    S, B, E = x.shape

    pos = jnp.asarray(pos_table)
    if pos.ndim == 2:
        pos = pos[:, None, :]
    assert pos.shape[0] >= S and pos.shape[-1] == E
    pos_slice = pos[:S].astype(jnp.float32)              # (S, 1, E)

    itemsize = jnp.dtype(x.dtype).itemsize
    TS, TB = _choose_tiles(S, B, E, itemsize)
    grid = (_cdiv(S, TS), _cdiv(B, TB))                  # partial blocks OK

    apply_dropout = bool(training) and float(dropout_rate) > 0.0
    # The TPU hardware PRNG has no CPU/interpret lowering; fall back to
    # host-generated bits when not running on a real TPU backend.
    hw_prng = apply_dropout and jax.default_backend() == "tpu"

    keep_prob = 1.0 - float(dropout_rate)
    inv_keep_prob = 1.0 / keep_prob if keep_prob > 0.0 else 1.0
    keep_threshold = min(int(round(keep_prob * float(1 << 32))), (1 << 32) - 1)

    kernel = functools.partial(
        _pe_kernel,
        apply_dropout=apply_dropout,
        hw_prng=hw_prng,
        inv_keep_prob=inv_keep_prob,
        keep_threshold=keep_threshold,
    )

    x_spec = pl.BlockSpec((TS, TB, E), lambda si, bi, seed_ref: (si, bi, 0))
    pos_spec = pl.BlockSpec((TS, 1, E), lambda si, bi, seed_ref: (si, 0, 0))

    in_specs = [x_spec, pos_spec]
    args = [x, pos_slice]
    if apply_dropout and not hw_prng:
        bits = jax.random.bits(jax.random.PRNGKey(seed), (S, B, E),
                               dtype=jnp.uint32)
        in_specs.append(x_spec)
        args.append(bits)

    seed_arr = jnp.array([seed], dtype=jnp.int32)

    out = pl.pallas_call(
        kernel,
        out_shape=jax.ShapeDtypeStruct((S, B, E), x.dtype),
        grid_spec=pltpu.PrefetchScalarGridSpec(
            num_scalar_prefetch=1,
            grid=grid,
            in_specs=in_specs,
            out_specs=x_spec,
        ),
        compiler_params=pltpu.CompilerParams(
            # S-tile axis sharded across cores; batch-tile axis kept
            # "arbitrary" so the pos block index stays constant on the inner
            # axis and its DMA is elided.
            dimension_semantics=("parallel", "arbitrary"),
            vmem_limit_bytes=48 * 1024 * 1024,
        ),
    )(seed_arr, *args)
    return out


# ----------------------------------------------------------------------------
# Self-test.
# ----------------------------------------------------------------------------
if __name__ == "__main__":
    S, B, E = 8, 2, 32          # small shapes, seq-first (PyTorch convention)
    MAXLEN = 64
    DROPOUT = 0.1

    key = jax.random.PRNGKey(0)
    x = jax.random.normal(key, (S, B, E), dtype=jnp.float32)
    pos_table = _make_pos_table(E, MAXLEN)                # (MAXLEN, 1, E)

    # --- eval mode (dropout = identity) ---
    out = positional_encoding(x, pos_table, dropout_rate=DROPOUT, training=False)
    out = jax.block_until_ready(out)
    ref = x + pos_table[:S]                               # (S,1,E) broadcast
    assert out.shape == (S, B, E)
    assert jnp.allclose(out, ref, atol=1e-6), "eval mismatch vs reference"

    # --- training mode (inverted dropout; HW PRNG on TPU, host bits otherwise)
    out_tr = positional_encoding(x, pos_table, dropout_rate=DROPOUT,
                                 training=True, seed=123)
    out_tr = jax.block_until_ready(out_tr)
    keep_prob = 1.0 - DROPOUT
    kept = out_tr != 0.0
    scaled_ref = ref / keep_prob
    kept_ok = jnp.where(kept, jnp.abs(out_tr - scaled_ref) < 1e-4, True)
    assert bool(jnp.all(kept_ok)), "kept elements not scaled correctly"
    frac_kept = float(jnp.mean(kept.astype(jnp.float32)))
    assert 0.6 < frac_kept <= 1.0, f"implausible keep fraction {frac_kept}"

    print("KERNEL_OK")
</pallas_src>

<mosaic_0001>
module attributes {stable_mosaic.version = 11 : i64} {
  func.func @_pe_kernel(%arg0: i32, %arg1: i32, %arg2: memref<1xi32, #tpu.memory_space<smem>>, %arg3: memref<8x2x32xf32, #tpu.memory_space<vmem>>, %arg4: memref<8x1x32xf32, #tpu.memory_space<vmem>>, %arg5: memref<8x2x32xf32, #tpu.memory_space<vmem>>) attributes {dimension_semantics = [#tpu.dimension_semantics<parallel>, #tpu.dimension_semantics<arbitrary>], iteration_bounds = array<i64: 1, 1>, scalar_prefetch = 1 : i64, scratch_operands = 0 : i64, tpu.core_type = #tpu.core_type<tc>, window_params = [{transform_indices = @transform_0, window_bounds = array<i64: 8, 2, 32>}, {transform_indices = @transform_1, window_bounds = array<i64: 8, 1, 32>}, {transform_indices = @transform_2, window_bounds = array<i64: 8, 2, 32>}]} {
    %c0 = arith.constant 0 : index
    %c0_0 = arith.constant 0 : index
    %c0_1 = arith.constant 0 : index
    %0 = vector.load %arg3[%c0, %c0_0, %c0_1] : memref<8x2x32xf32, #tpu.memory_space<vmem>>, vector<8x2x32xf32>
    %c0_2 = arith.constant 0 : index
    %c0_3 = arith.constant 0 : index
    %c0_4 = arith.constant 0 : index
    %1 = vector.load %arg4[%c0_2, %c0_3, %c0_4] : memref<8x1x32xf32, #tpu.memory_space<vmem>>, vector<8x1x32xf32>
    %2 = vector.broadcast %1 : vector<8x1x32xf32> to vector<8x2x32xf32>
    %3 = arith.addf %0, %2 : vector<8x2x32xf32>
    %c0_5 = arith.constant 0 : index
    %c0_6 = arith.constant 0 : index
    %c0_7 = arith.constant 0 : index
    %4 = vector.load %arg5[%c0_5, %c0_6, %c0_7] : memref<8x2x32xf32, #tpu.memory_space<vmem>>, vector<8x2x32xf32>
    tpu.vector_store %arg5[%c0_5, %c0_6, %c0_7], %3 {strides = array<i32>} : memref<8x2x32xf32, #tpu.memory_space<vmem>>, vector<8x2x32xf32>,
    return
  }
  func.func @transform_0(%arg0: i32, %arg1: i32, %arg2: memref<1xi32, #tpu.memory_space<smem>>) -> (i32, i32, i32) {
    %c0_i32 = arith.constant 0 : i32
    %c0_i32_0 = arith.constant 0 : i32
    return %arg0, %arg1, %c0_i32 : i32, i32, i32
  }
  func.func @transform_1(%arg0: i32, %arg1: i32, %arg2: memref<1xi32, #tpu.memory_space<smem>>) -> (i32, i32, i32) {
    %c0_i32 = arith.constant 0 : i32
    %c0_i32_0 = arith.constant 0 : i32
    %c0_i32_1 = arith.constant 0 : i32
    return %arg0, %c0_i32, %c0_i32_0 : i32, i32, i32
  }
  func.func @transform_2(%arg0: i32, %arg1: i32, %arg2: memref<1xi32, #tpu.memory_space<smem>>) -> (i32, i32, i32) {
    %c0_i32 = arith.constant 0 : i32
    %c0_i32_0 = arith.constant 0 : i32
    return %arg0, %arg1, %c0_i32 : i32, i32, i32
  }
}

</mosaic_0001>

<llo_original>
// kernel: tpu_custom_call.1
$region0: #{tpu_custom_call.1}
  #allocation0 [shape = 'u32[]', space=smem, size = 0x4, offset = 0x4, fixed_abs, tag = 'smem constant byte address 0x4 - core index']
  #allocation1 [shape = 'u32[144,128]{1,0:T(1,128)}', space=vmem, size = 0x12000, scoped, tag = 'internal scratch']
  #allocation2 [shape = 's32[1]{0}', space=sflag, size = 0x4, scoped, tag = 'scoped memory for tpu_custom_call.1']
  #allocation3 [shape = 's32[1]{0:T(128)S(6)}', space=smem, size = 0x200, scoped, tag = 'prefetched SMEM operand 0']
  %s0 = inlined_call_operand.<no memory space> [shape: s32[1], index: 0, kind: input, shape index: {}]
  %s1 = inlined_call_operand.hbm [shape: f32[8,2,32], index: 1, kind: input, shape index: {}]
  %s2 = inlined_call_operand.hbm [shape: f32[8,1,32], index: 2, kind: input, shape index: {}]
  %s3 = inlined_call_operand.hbm [shape: f32[8,2,32], index: 3, kind: output, shape index: {}]
  %s4 = sld [smem:[#allocation0]]
  $region26: #{tpu_custom_call.1} parent=0
    _
  %s6 = ssub.s32 1, %s4
  %s7 = scalar_select 0, %s6, %s4
  %8 = sst [smem:[#allocation3]] %s0
  $region1: #{tpu_custom_call.1} parent=0
    #allocation4 [shape = 'u8[8192]{0}', space=vmem, size = 0x2000, scoped, tag = 'input window, operand 1, single buffered']
    #allocation5 [shape = 's32[1]{0}', space=sflag, size = 0x4, scoped, tag = 'scoped memory for tpu_custom_call.1']
    #allocation6 [shape = 's32[1]{0}', space=sflag, size = 0x4, scoped, tag = 'scoped memory for tpu_custom_call.1']
    #allocation7 [shape = 'u8[4096]{0}', space=vmem, size = 0x1000, scoped, tag = 'input window, operand 2, single buffered']
    #allocation8 [shape = 's32[1]{0}', space=sflag, size = 0x4, scoped, tag = 'scoped memory for tpu_custom_call.1']
    #allocation9 [shape = 'u8[8192]{0}', space=vmem, size = 0x2000, scoped, tag = 'output window, operand 0, single buffered']
    %9 = vsyncpa [#allocation5], 0
    %10 = vsyncpa [#allocation8], 0
    %11 = vsyncpa [#allocation6], 0
    // Predicated region
    $region2: #{tpu_custom_call.1} parent=1 // pred_check
      _
    $region3: #{tpu_custom_call.1} parent=1 // pred_check_branch
      %13 = sbr.rel (0) target = $region5
    $region4: #{tpu_custom_call.1} parent=1 // pred_region
      %s15 = ssub.s32 256, 256
      %16 = vsyncadd [#allocation5], %s15
      %s17 = sshll.u32 [#allocation4], 4
      %s18 = int_to_ptr.vmem [resolvable:$true] %s17
      %23 = dma.hbm_to_vmem [thread:$0]  %s1, 256, %s18, [#allocation5], 32, 32, 2
    $region5: #{tpu_custom_call.1} parent=1 // pred_fallthru
      _
    // Predicated region
    $region6: #{tpu_custom_call.1} parent=1 // pred_check
      _
    $region7: #{tpu_custom_call.1} parent=1 // pred_check_branch
      %25 = sbr.rel (0) target = $region9
    $region8: #{tpu_custom_call.1} parent=1 // pred_region
      %s27 = ssub.s32 128, 128
      %28 = vsyncadd [#allocation8], %s27
      %s29 = sshll.u32 [#allocation7], 4
      %s30 = int_to_ptr.vmem [resolvable:$true] %s29
      %35 = dma.hbm_to_vmem [thread:$0]  %s2, 128, %s30, [#allocation8], 16, 16, 1
    $region9: #{tpu_custom_call.1} parent=1 // pred_fallthru
      _
    // Predicated region
    $region10: #{tpu_custom_call.1} parent=1 // pred_check
      _
    $region11: #{tpu_custom_call.1} parent=1 // pred_check_branch
      %37 = sbr.rel (0) target = $region13
    $region12: #{tpu_custom_call.1} parent=1 // pred_region
      %38 = dma.done [#allocation5], 256
    $region13: #{tpu_custom_call.1} parent=1 // pred_fallthru
      _
    // Predicated region
    $region14: #{tpu_custom_call.1} parent=1 // pred_check
      _
    $region15: #{tpu_custom_call.1} parent=1 // pred_check_branch
      %40 = sbr.rel (0) target = $region17
    $region16: #{tpu_custom_call.1} parent=1 // pred_region
      %41 = dma.done [#allocation8], 128
    $region17: #{tpu_custom_call.1} parent=1 // pred_fallthru
      _
    %v42 = vld [vmem:[#allocation4] sm:$0x3]
    %v43 = vld [vmem:[#allocation4 + $0x2] sm:$0x3]
    %v44 = vld [vmem:[#allocation4 + $0x4] sm:$0x3]
    %v45 = vld [vmem:[#allocation4 + $0x6] sm:$0x3]
    %v46 = vld [vmem:[#allocation4 + $0x8] sm:$0x3]
    %v47 = vld [vmem:[#allocation4 + $0xa] sm:$0x3]
    %v48 = vld [vmem:[#allocation4 + $0xc] sm:$0x3]
    %v49 = vld [vmem:[#allocation4 + $0xe] sm:$0x3]
    %v50 = vld [vmem:[#allocation7] sm:$0x1]
    %v51 = vld [vmem:[#allocation7 + $0x1] sm:$0x1]
    %v52 = vld [vmem:[#allocation7 + $0x2] sm:$0x1]
    %v53 = vld [vmem:[#allocation7 + $0x3] sm:$0x1]
    %v54 = vld [vmem:[#allocation7 + $0x4] sm:$0x1]
    %v55 = vld [vmem:[#allocation7 + $0x5] sm:$0x1]
    %v56 = vld [vmem:[#allocation7 + $0x6] sm:$0x1]
    %v57 = vld [vmem:[#allocation7 + $0x7] sm:$0x1]
    %v66 = vlaneseq
    %v67 = vshrl.u32 %v66, 7
    %v68 = vsub.s32 0, %v67
    %v69 = vrot.slane %v50, %v68
    %v70 = vlaneseq
    %v71 = vshrl.u32 %v70, 7
    %v72 = vsub.s32 0, %v71
    %v73 = vrot.slane %v51, %v72
    %v74 = vlaneseq
    %v75 = vshrl.u32 %v74, 7
    %v76 = vsub.s32 0, %v75
    %v77 = vrot.slane %v52, %v76
    %v78 = vlaneseq
    %v79 = vshrl.u32 %v78, 7
    %v80 = vsub.s32 0, %v79
    %v81 = vrot.slane %v53, %v80
    %v82 = vlaneseq
    %v83 = vshrl.u32 %v82, 7
    %v84 = vsub.s32 0, %v83
    %v85 = vrot.slane %v54, %v84
    %v86 = vlaneseq
    %v87 = vshrl.u32 %v86, 7
    %v88 = vsub.s32 0, %v87
    %v89 = vrot.slane %v55, %v88
    %v90 = vlaneseq
    %v91 = vshrl.u32 %v90, 7
    %v92 = vsub.s32 0, %v91
    %v93 = vrot.slane %v56, %v92
    %v94 = vlaneseq
    %v95 = vshrl.u32 %v94, 7
    %v96 = vsub.s32 0, %v95
    %v97 = vrot.slane %v57, %v96
    %v106 = vadd.f32 %v42, %v69
    %v107 = vadd.f32 %v43, %v73
    %v108 = vadd.f32 %v44, %v77
    %v109 = vadd.f32 %v45, %v81
    %v110 = vadd.f32 %v46, %v85
    %v111 = vadd.f32 %v47, %v89
    %v112 = vadd.f32 %v48, %v93
    %v113 = vadd.f32 %v49, %v97
    %vm114 = vcmask 254976
    %115 = vst.msk [vmem:[#allocation9] sm:$0x3] %vm114, %v106
    %116 = vst.msk [vmem:[#allocation9 + $0x2] sm:$0x3] %vm114, %v107
    %117 = vst.msk [vmem:[#allocation9 + $0x4] sm:$0x3] %vm114, %v108
    %118 = vst.msk [vmem:[#allocation9 + $0x6] sm:$0x3] %vm114, %v109
    %119 = vst.msk [vmem:[#allocation9 + $0x8] sm:$0x3] %vm114, %v110
    %120 = vst.msk [vmem:[#allocation9 + $0xa] sm:$0x3] %vm114, %v111
    %121 = vst.msk [vmem:[#allocation9 + $0xc] sm:$0x3] %vm114, %v112
    %122 = vst.msk [vmem:[#allocation9 + $0xe] sm:$0x3] %vm114, %v113
    // Predicated region
    $region18: #{tpu_custom_call.1} parent=1 // pred_check
      _
    $region19: #{tpu_custom_call.1} parent=1 // pred_check_branch
      %124 = sbr.rel (0) target = $region21
    $region20: #{tpu_custom_call.1} parent=1 // pred_region
      %s126 = ssub.s32 256, 256
      %127 = vsyncadd [#allocation6], %s126
      %s128 = sshll.u32 [#allocation9], 4
      %s129 = int_to_ptr.vmem [resolvable:$true] %s128
      %134 = dma.vmem_to_hbm [thread:$0]  %s129, 256, %s3, [#allocation6], 32, 32, 2
    $region21: #{tpu_custom_call.1} parent=1 // pred_fallthru
      _
    // Predicated region
    $region22: #{tpu_custom_call.1} parent=1 // pred_check
      _
    $region23: #{tpu_custom_call.1} parent=1 // pred_check_branch
      %136 = sbr.rel (0) target = $region25
    $region24: #{tpu_custom_call.1} parent=1 // pred_region
      %137 = dma.done [#allocation6], 256
    $region25: #{tpu_custom_call.1} parent=1 // pred_fallthru
      _
    %138 = vsyncpa [#allocation5], 1
    %139 = vsyncpa [#allocation8], 1
    %140 = vsyncpa [#allocation6], 1

</llo_original>
